<compile_context>
chip_gen: v7x
topology: tpu7x:2x2x1
jax: 0.10.0
libtpu: 0.0.40
codegen_flags: <defaults>
</compile_context>

<pallas_src>
import math
import functools

import jax
import jax.numpy as jnp
from jax import lax
from jax.experimental import pallas as pl
from jax.experimental.pallas import tpu as pltpu

LN_EPS = 1e-5
_SQRT2 = math.sqrt(2.0)
_INV_SQRT2 = 1.0 / _SQRT2

_MIB = 1024 * 1024


def _round_up(x, m):
    return (x + m - 1) // m * m


def _tpu_vmem_bytes():
    """Physical per-core VMEM; conservative 64 MiB fallback (safe on v7x)."""
    try:
        return int(pltpu.get_tpu_info().vmem_capacity_bytes)
    except Exception:
        return 64 * _MIB


@functools.lru_cache(maxsize=None)
def _plan(in_dim, out_dim, compute_dtype_name, tk_max):
    """Static tiling/VMEM plan shared by prepare_params and the apply path."""
    cd_bytes = jnp.dtype(compute_dtype_name).itemsize
    out_p = _round_up(out_dim, 128)          # lane-dense output

    phys_vmem = _tpu_vmem_bytes()
    big_vmem = phys_vmem >= 96 * _MIB        # v5e/v6e (128 MiB) vs v7x (64 MiB)
    if big_vmem:
        vmem_cap = 100 * _MIB                # leave headroom below 128 MiB
        w_resident_budget = 32 * _MIB
        tk_cap = tk_max
    else:
        vmem_cap = 52 * _MIB                 # headroom below v7x's 64 MiB
        w_resident_budget = 14 * _MIB
        tk_cap = min(tk_max, 256)            # smaller pipelined tiles on v7x

    w_bytes = in_dim * out_p * cd_bytes
    if w_bytes <= w_resident_budget:
        # Weight stays VMEM-resident: whole reduction dim in one K tile, so the
        # weight block index is constant and Pallas fetches it exactly once.
        tk = in_dim
        k_pad = in_dim
    else:
        tk = tk_cap
        k_pad = _round_up(in_dim, tk)
    kt = k_pad // tk

    return dict(out_p=out_p, tk=tk, k_pad=k_pad, kt=kt,
                vmem_cap=vmem_cap, big_vmem=big_vmem)


def linear_block_kernel(x_ref, w_ref, g_ref, b_ref, o_ref, acc_ref, *,
                        out_valid, compute_dtype):
    # x_ref: (tm, tk) input dtype; w_ref: (tk, out_p) compute dtype
    # g_ref/b_ref: (1, out_p) f32; o_ref: (tm, out_p); acc_ref: (tm, out_p) f32
    k = pl.program_id(1)

    @pl.when(k == 0)
    def _():
        acc_ref[...] = jnp.zeros_like(acc_ref)

    # Cast x to the MXU compute dtype in-kernel (VPU work hidden under the MXU)
    # so the wrapper never materializes a casted copy of x in HBM.
    xv = x_ref[...]
    if xv.dtype != compute_dtype:
        xv = xv.astype(compute_dtype)
    acc_ref[...] += jnp.dot(xv, w_ref[...], preferred_element_type=jnp.float32)

    @pl.when(k == pl.num_programs(1) - 1)
    def _():
        y = acc_ref[...]                      # (tm, out_p) f32
        inv_n = 1.0 / out_valid

        # Single-pass LayerNorm stats over the valid out_dim columns.  Padded
        # weight columns are exactly zero, so they contribute nothing to either
        # sum — no mask needed.
        sum_y = jnp.sum(y, axis=-1, keepdims=True)
        sum_y2 = jnp.sum(y * y, axis=-1, keepdims=True)
        mean = sum_y * inv_n
        var = jnp.maximum(sum_y2 * inv_n - mean * mean, 0.0)
        y_norm = (y - mean) * lax.rsqrt(var + LN_EPS)
        y_norm = y_norm * g_ref[...] + b_ref[...]

        # Exact GELU (erf form) — matches torch.nn.GELU() default.  Kept in f32
        # for accuracy; padded columns stay finite (gamma pad = 1, beta pad = 0)
        # and are sliced off in the wrapper.
        out = 0.5 * y_norm * (1.0 + lax.erf(y_norm * _INV_SQRT2))
        o_ref[...] = out.astype(o_ref.dtype)


def prepare_params(w, gamma, beta, *, compute_dtype=jnp.bfloat16, tk_max=512):
    """One-time operand prep: cast the weight to the compute dtype and pad the
    weight / LayerNorm params to the kernel's lane-dense layout.  Do this once
    outside the hot loop and feed the results to linear_block_apply()."""
    in_dim, out_dim = w.shape
    plan = _plan(in_dim, out_dim, jnp.dtype(compute_dtype).name, tk_max)
    k_pad, out_p = plan["k_pad"], plan["out_p"]

    wc = w.astype(compute_dtype)
    if k_pad != in_dim or out_p != out_dim:
        wc = jnp.pad(wc, ((0, k_pad - in_dim), (0, out_p - out_dim)))

    g2 = gamma.astype(jnp.float32)
    b2 = beta.astype(jnp.float32)
    if out_p != out_dim:
        g2 = jnp.pad(g2, (0, out_p - out_dim), constant_values=1.0)
        b2 = jnp.pad(b2, (0, out_p - out_dim))
    return wc, g2.reshape(1, out_p), b2.reshape(1, out_p)


@functools.partial(
    jax.jit,
    static_argnames=("out_dim", "tm", "tk_max", "compute_dtype", "out_dtype"))
def linear_block_apply(x, wc, g2, b2, *, out_dim, tm=256, tk_max=512,
                       compute_dtype=jnp.bfloat16, out_dtype=None):
    """Hot path.  x: (..., in_dim); wc/g2/b2 from prepare_params()."""
    og_shape = x.shape
    in_dim = og_shape[-1]
    compute_dtype = jnp.dtype(compute_dtype)
    plan = _plan(in_dim, out_dim, compute_dtype.name, tk_max)
    out_p, k_pad, tk, kt = plan["out_p"], plan["k_pad"], plan["tk"], plan["kt"]

    assert wc.shape == (k_pad, out_p), (wc.shape, (k_pad, out_p))
    assert wc.dtype == compute_dtype, (wc.dtype, compute_dtype)

    out_dtype = jnp.dtype(out_dtype) if out_dtype is not None else x.dtype

    x2 = x.reshape(-1, in_dim)
    m = x2.shape[0]

    # Row tiling: bump the target tile when the weight must be re-streamed on
    # big-VMEM parts (more matmul flops per streamed weight byte), then balance
    # tiles across the actual row count (8-aligned) to avoid near-full-tile
    # padding waste on ragged m.
    tm_target = tm
    if kt > 1 and plan["big_vmem"]:
        tm_target = max(tm, 512)
    n_row = max(1, -(-m // tm_target))
    tm_eff = min(_round_up(-(-m // n_row), 8), _round_up(m, 8))
    m_pad = _round_up(m, tm_eff)

    if m_pad != m or k_pad != in_dim:
        x2 = jnp.pad(x2, ((0, m_pad - m), (0, k_pad - in_dim)))

    # Generation-aware scoped VMEM budget (double-buffered tiles + f32 acc).
    x_bytes = x2.dtype.itemsize
    cd_bytes = compute_dtype.itemsize
    o_bytes = out_dtype.itemsize
    vmem_est = (2 * tm_eff * tk * x_bytes        # x tiles (double buffered)
                + 2 * tk * out_p * cd_bytes      # weight tiles
                + 2 * tm_eff * out_p * o_bytes   # output tiles
                + tm_eff * out_p * 4             # f32 accumulator scratch
                + 4 * out_p * 4)                 # gamma / beta
    vmem_limit = int(min(plan["vmem_cap"], max(32 * _MIB, 2 * vmem_est)))

    kernel = functools.partial(linear_block_kernel, out_valid=out_dim,
                               compute_dtype=compute_dtype)

    # TODO(synk): sweep pipeline_mode=pl.Buffered(3) on the weight BlockSpec for
    # the streamed-weight (kt > 1) case if the K-tile DMA shows up exposed.
    out2 = pl.pallas_call(
        kernel,
        out_shape=jax.ShapeDtypeStruct((m_pad, out_p), out_dtype),
        grid_spec=pltpu.PrefetchScalarGridSpec(
            num_scalar_prefetch=0,
            grid=(m_pad // tm_eff, kt),
            in_specs=[
                pl.BlockSpec((tm_eff, tk), lambda i, k: (i, k)),
                pl.BlockSpec((tk, out_p), lambda i, k: (k, 0)),
                pl.BlockSpec((1, out_p), lambda i, k: (0, 0)),
                pl.BlockSpec((1, out_p), lambda i, k: (0, 0)),
            ],
            out_specs=pl.BlockSpec((tm_eff, out_p), lambda i, k: (i, 0)),
            scratch_shapes=[pltpu.VMEM((tm_eff, out_p), jnp.float32)],
        ),
        compiler_params=pltpu.CompilerParams(
            dimension_semantics=("parallel", "arbitrary"),
            vmem_limit_bytes=vmem_limit,
        ),
    )(x2, wc, g2, b2)

    out2 = out2[:m, :out_dim]
    return out2.reshape(*og_shape[:-1], out_dim)


def linear_block(x, w, gamma, beta, *, tm=256, tk_max=512,
                 compute_dtype=jnp.bfloat16, out_dtype=None):
    """Convenience entry that preps params every call.  For repeated use, call
    prepare_params() once and use linear_block_apply() on the hot path."""
    wc, g2, b2 = prepare_params(w, gamma, beta, compute_dtype=compute_dtype,
                                tk_max=tk_max)
    return linear_block_apply(x, wc, g2, b2, out_dim=w.shape[1], tm=tm,
                              tk_max=tk_max, compute_dtype=compute_dtype,
                              out_dtype=out_dtype)


def reference(x, w, gamma, beta):
    og_shape = x.shape
    x2 = x.reshape(-1, og_shape[-1]).astype(jnp.float32)
    y = x2 @ w.astype(jnp.float32)
    mean = jnp.mean(y, axis=-1, keepdims=True)
    var = jnp.mean((y - mean) ** 2, axis=-1, keepdims=True)
    yn = (y - mean) / jnp.sqrt(var + LN_EPS)
    yn = yn * gamma + beta
    out = 0.5 * yn * (1.0 + lax.erf(yn / _SQRT2))
    return out.reshape(*og_shape[:-1], -1).astype(x.dtype)


if __name__ == "__main__":
    batch, seq, in_dim, out_dim = 2, 8, 32, 64

    key = jax.random.PRNGKey(0)
    kx, kw, kx2 = jax.random.split(key, 3)

    x = jax.random.normal(kx, (batch, seq, in_dim), dtype=jnp.float32)

    # Deterministic parameter init (PyTorch-like kaiming-uniform bound for Linear)
    bound = 1.0 / math.sqrt(in_dim)
    w = jax.random.uniform(kw, (in_dim, out_dim), dtype=jnp.float32,
                           minval=-bound, maxval=bound)
    gamma = jnp.ones((out_dim,), dtype=jnp.float32)   # LayerNorm weight
    beta = jnp.zeros((out_dim,), dtype=jnp.float32)   # LayerNorm bias

    ref = reference(x, w, gamma, beta)

    # f32 MXU path (prepared-operand hot path): tight check vs f32 reference.
    wc32, g32, b32 = prepare_params(w, gamma, beta, compute_dtype=jnp.float32)
    out_f32 = jax.block_until_ready(
        linear_block_apply(x, wc32, g32, b32, out_dim=out_dim,
                           compute_dtype=jnp.float32))
    assert out_f32.shape == (batch, seq, out_dim), out_f32.shape
    assert jnp.allclose(out_f32, ref, atol=1e-5, rtol=1e-5), float(
        jnp.max(jnp.abs(out_f32 - ref)))

    # Default bf16 MXU path (fast): prepared operands, looser tolerance.
    wcb, gb, bb = prepare_params(w, gamma, beta, compute_dtype=jnp.bfloat16)
    out_bf16 = jax.block_until_ready(
        linear_block_apply(x, wcb, gb, bb, out_dim=out_dim))
    assert out_bf16.shape == (batch, seq, out_dim), out_bf16.shape
    assert jnp.allclose(out_bf16, ref, atol=3e-2, rtol=3e-2), float(
        jnp.max(jnp.abs(out_bf16 - ref)))

    # Ragged row count + out_dim needing lane padding, via the convenience path.
    x_r = jax.random.normal(kx2, (5, 7, 48), dtype=jnp.float32)
    bound_r = 1.0 / math.sqrt(48)
    w_r = jax.random.uniform(kw, (48, 96), dtype=jnp.float32,
                             minval=-bound_r, maxval=bound_r)
    g_r = jnp.ones((96,), dtype=jnp.float32)
    b_r = jnp.zeros((96,), dtype=jnp.float32)
    out_r = jax.block_until_ready(linear_block(x_r, w_r, g_r, b_r))
    ref_r = reference(x_r, w_r, g_r, b_r)
    assert out_r.shape == (5, 7, 96), out_r.shape
    assert jnp.allclose(out_r, ref_r, atol=3e-2, rtol=3e-2), float(
        jnp.max(jnp.abs(out_r - ref_r)))

    print("KERNEL_OK")
</pallas_src>

<mosaic_0001>
module attributes {stable_mosaic.version = 11 : i64} {
  func.func @linear_block_kernel(%arg0: i32, %arg1: i32, %arg2: memref<16x32xf32, #tpu.memory_space<vmem>>, %arg3: memref<32x128xf32, #tpu.memory_space<vmem>>, %arg4: memref<1x128xf32, #tpu.memory_space<vmem>>, %arg5: memref<1x128xf32, #tpu.memory_space<vmem>>, %arg6: memref<16x128xf32, #tpu.memory_space<vmem>>, %arg7: memref<16x128xf32, #tpu.memory_space<vmem>>) attributes {dimension_semantics = [#tpu.dimension_semantics<parallel>, #tpu.dimension_semantics<arbitrary>], iteration_bounds = array<i64: 1, 1>, scalar_prefetch = 0 : i64, scratch_operands = 1 : i64, tpu.core_type = #tpu.core_type<tc>, window_params = [{transform_indices = @transform_0, window_bounds = array<i64: 16, 32>}, {transform_indices = @transform_1, window_bounds = array<i64: 32, 128>}, {pipeline_mode = #tpu.pipeline_mode<synchronous>, transform_indices = @transform_2, window_bounds = array<i64: 1, 128>}, {pipeline_mode = #tpu.pipeline_mode<synchronous>, transform_indices = @transform_3, window_bounds = array<i64: 1, 128>}, {transform_indices = @transform_4, window_bounds = array<i64: 16, 128>}]} {
    %c0_i32 = arith.constant 0 : i32
    %0 = arith.cmpi eq, %arg1, %c0_i32 : i32
    %1 = arith.extui %0 : i1 to i32
    %c0_i32_0 = arith.constant 0 : i32
    %2 = arith.cmpi ne, %1, %c0_i32_0 : i32
    scf.if %2 {
      %cst_10 = arith.constant 0.000000e+00 : f32
      %12 = vector.broadcast %cst_10 : f32 to vector<16x128xf32>
      %c0_11 = arith.constant 0 : index
      %c0_12 = arith.constant 0 : index
      %13 = vector.load %arg7[%c0_11, %c0_12] : memref<16x128xf32, #tpu.memory_space<vmem>>, vector<16x128xf32>
      tpu.vector_store %arg7[%c0_11, %c0_12], %12 {strides = array<i32>} : memref<16x128xf32, #tpu.memory_space<vmem>>, vector<16x128xf32>,
    } else {
    }
    %c0 = arith.constant 0 : index
    %c0_1 = arith.constant 0 : index
    %3 = vector.load %arg2[%c0, %c0_1] : memref<16x32xf32, #tpu.memory_space<vmem>>, vector<16x32xf32>
    %c0_2 = arith.constant 0 : index
    %c0_3 = arith.constant 0 : index
    %4 = vector.load %arg7[%c0_2, %c0_3] : memref<16x128xf32, #tpu.memory_space<vmem>>, vector<16x128xf32>
    %c0_4 = arith.constant 0 : index
    %c0_5 = arith.constant 0 : index
    %5 = vector.load %arg3[%c0_4, %c0_5] : memref<32x128xf32, #tpu.memory_space<vmem>>, vector<32x128xf32>
    %cst = arith.constant dense<0.000000e+00> : vector<16x128xf32>
    %6 = tpu.matmul %3, %5, %cst {dimension_numbers = #tpu.dot_dimension_numbers<[1], [0], [0], [1], [0, 0, 1, 1], [], []>} : vector<16x32xf32>, vector<32x128xf32>, vector<16x128xf32> -> vector<16x128xf32>
    %7 = arith.addf %4, %6 : vector<16x128xf32>
    %c0_6 = arith.constant 0 : index
    %c0_7 = arith.constant 0 : index
    %8 = vector.load %arg7[%c0_6, %c0_7] : memref<16x128xf32, #tpu.memory_space<vmem>>, vector<16x128xf32>
    tpu.vector_store %arg7[%c0_6, %c0_7], %7 {strides = array<i32>} : memref<16x128xf32, #tpu.memory_space<vmem>>, vector<16x128xf32>,
    %c0_i32_8 = arith.constant 0 : i32
    %9 = arith.cmpi eq, %arg1, %c0_i32_8 : i32
    %10 = arith.extui %9 : i1 to i32
    %c0_i32_9 = arith.constant 0 : i32
    %11 = arith.cmpi ne, %10, %c0_i32_9 : i32
    scf.if %11 {
      %c0_10 = arith.constant 0 : index
      %c0_11 = arith.constant 0 : index
      %12 = vector.load %arg7[%c0_10, %c0_11] : memref<16x128xf32, #tpu.memory_space<vmem>>, vector<16x128xf32>
      %cst_12 = arith.constant dense<0.000000e+00> : vector<16xf32>
      %13 = vector.multi_reduction <add>, %12, %cst_12 [1] : vector<16x128xf32> to vector<16xf32>
      %14 = vector.shape_cast %13 : vector<16xf32> to vector<16x1xf32>
      %15 = arith.mulf %12, %12 : vector<16x128xf32>
      %cst_13 = arith.constant dense<0.000000e+00> : vector<16xf32>
      %16 = vector.multi_reduction <add>, %15, %cst_13 [1] : vector<16x128xf32> to vector<16xf32>
      %17 = vector.shape_cast %16 : vector<16xf32> to vector<16x1xf32>
      %cst_14 = arith.constant 1.562500e-02 : f32
      %18 = vector.broadcast %cst_14 : f32 to vector<16x1xf32>
      %19 = arith.mulf %14, %18 : vector<16x1xf32>
      %cst_15 = arith.constant 1.562500e-02 : f32
      %20 = vector.broadcast %cst_15 : f32 to vector<16x1xf32>
      %21 = arith.mulf %17, %20 : vector<16x1xf32>
      %22 = arith.mulf %19, %19 : vector<16x1xf32>
      %23 = arith.subf %21, %22 : vector<16x1xf32>
      %cst_16 = arith.constant 0.000000e+00 : f32
      %24 = vector.broadcast %cst_16 : f32 to vector<16x1xf32>
      %25 = arith.maximumf %23, %24 : vector<16x1xf32>
      %26 = vector.broadcast %19 : vector<16x1xf32> to vector<16x128xf32>
      %27 = arith.subf %12, %26 : vector<16x128xf32>
      %cst_17 = arith.constant 9.99999974E-6 : f32
      %28 = vector.broadcast %cst_17 : f32 to vector<16x1xf32>
      %29 = arith.addf %25, %28 : vector<16x1xf32>
      %30 = math.rsqrt %29 : vector<16x1xf32>
      %31 = vector.broadcast %30 : vector<16x1xf32> to vector<16x128xf32>
      %32 = arith.mulf %27, %31 : vector<16x128xf32>
      %c0_18 = arith.constant 0 : index
      %c0_19 = arith.constant 0 : index
      %33 = vector.load %arg4[%c0_18, %c0_19] : memref<1x128xf32, #tpu.memory_space<vmem>>, vector<1x128xf32>
      %34 = vector.broadcast %33 : vector<1x128xf32> to vector<16x128xf32>
      %35 = arith.mulf %32, %34 : vector<16x128xf32>
      %c0_20 = arith.constant 0 : index
      %c0_21 = arith.constant 0 : index
      %36 = vector.load %arg5[%c0_20, %c0_21] : memref<1x128xf32, #tpu.memory_space<vmem>>, vector<1x128xf32>
      %37 = vector.broadcast %36 : vector<1x128xf32> to vector<16x128xf32>
      %38 = arith.addf %35, %37 : vector<16x128xf32>
      %cst_22 = arith.constant 5.000000e-01 : f32
      %39 = vector.broadcast %cst_22 : f32 to vector<16x128xf32>
      %40 = arith.mulf %39, %38 : vector<16x128xf32>
      %cst_23 = arith.constant 0.707106769 : f32
      %41 = vector.broadcast %cst_23 : f32 to vector<16x128xf32>
      %42 = arith.mulf %38, %41 : vector<16x128xf32>
      %43 = math.erf %42 : vector<16x128xf32>
      %cst_24 = arith.constant 1.000000e+00 : f32
      %44 = vector.broadcast %cst_24 : f32 to vector<16x128xf32>
      %45 = arith.addf %44, %43 : vector<16x128xf32>
      %46 = arith.mulf %40, %45 : vector<16x128xf32>
      %c0_25 = arith.constant 0 : index
      %c0_26 = arith.constant 0 : index
      %47 = vector.load %arg6[%c0_25, %c0_26] : memref<16x128xf32, #tpu.memory_space<vmem>>, vector<16x128xf32>
      tpu.vector_store %arg6[%c0_25, %c0_26], %46 {strides = array<i32>} : memref<16x128xf32, #tpu.memory_space<vmem>>, vector<16x128xf32>,
    } else {
    }
    return
  }
  func.func @transform_0(%arg0: i32, %arg1: i32) -> (i32, i32) {
    %c0_i32 = arith.constant 0 : i32
    return %arg0, %arg1 : i32, i32
  }
  func.func @transform_1(%arg0: i32, %arg1: i32) -> (i32, i32) {
    %c0_i32 = arith.constant 0 : i32
    %c0_i32_0 = arith.constant 0 : i32
    return %arg1, %c0_i32 : i32, i32
  }
  func.func @transform_2(%arg0: i32, %arg1: i32) -> (i32, i32) {
    %c0_i32 = arith.constant 0 : i32
    %c0_i32_0 = arith.constant 0 : i32
    %c0_i32_1 = arith.constant 0 : i32
    return %c0_i32, %c0_i32_0 : i32, i32
  }
  func.func @transform_3(%arg0: i32, %arg1: i32) -> (i32, i32) {
    %c0_i32 = arith.constant 0 : i32
    %c0_i32_0 = arith.constant 0 : i32
    %c0_i32_1 = arith.constant 0 : i32
    return %c0_i32, %c0_i32_0 : i32, i32
  }
  func.func @transform_4(%arg0: i32, %arg1: i32) -> (i32, i32) {
    %c0_i32 = arith.constant 0 : i32
    %c0_i32_0 = arith.constant 0 : i32
    return %arg0, %c0_i32 : i32, i32
  }
}

</mosaic_0001>

<llo_original>
// kernel: linear_block_apply.1
$region0: #{linear_block_apply.1}
  #allocation0 [shape = 'u32[]', space=smem, size = 0x4, offset = 0x4, fixed_abs, tag = 'smem constant byte address 0x4 - core index']
  #allocation1 [shape = 'u32[144,128]{1,0:T(1,128)}', space=vmem, size = 0x12000, scoped, tag = 'internal scratch']
  #allocation2 [shape = 'f32[16,128]{1,0:T(8,128)}', space=vmem, size = 0x2000, scoped, tag = 'scratch operand']
  %s0 = inlined_call_operand.hbm [shape: f32[16,32], index: 0, kind: input, shape index: {}]
  %s1 = inlined_call_operand.hbm [shape: f32[32,128], index: 1, kind: input, shape index: {}]
  %s2 = inlined_call_operand.vmem [shape: f32[1,128], index: 2, kind: input, shape index: {}]
  %s3 = inlined_call_operand.vmem [shape: f32[1,128], index: 3, kind: input, shape index: {}]
  %s4 = inlined_call_operand.vmem [shape: f32[16,128], index: 4, kind: output, shape index: {}]
  %s5 = sld [smem:[#allocation0]]
  $region42: #{linear_block_apply.1} parent=0
    _
  %s7 = ssub.s32 1, %s5
  %s8 = scalar_select 0, %s7, %s5
  $region1: #{linear_block_apply.1} parent=0
    #allocation3 [shape = 'u8[8192]{0}', space=vmem, size = 0x2000, scoped, tag = 'input window, operand 0, single buffered']
    #allocation4 [shape = 's32[1]{0}', space=sflag, size = 0x4, scoped, tag = 'scoped memory for linear_block_apply.1']
    #allocation5 [shape = 'u8[16384]{0}', space=vmem, size = 0x4000, scoped, tag = 'input window, operand 1, single buffered']
    #allocation6 [shape = 's32[1]{0}', space=sflag, size = 0x4, scoped, tag = 'scoped memory for linear_block_apply.1']
    %9 = vsyncpa [#allocation4], 0
    %10 = vsyncpa [#allocation6], 0
    // Predicated region
    $region2: #{linear_block_apply.1} parent=1 // pred_check
      _
    $region3: #{linear_block_apply.1} parent=1 // pred_check_branch
      %12 = sbr.rel (0) target = $region5
    $region4: #{linear_block_apply.1} parent=1 // pred_region
      %s14 = ssub.s32 256, 256
      %15 = vsyncadd [#allocation4], %s14
      %s16 = sshll.u32 [#allocation3], 4
      %s17 = int_to_ptr.vmem [resolvable:$true] %s16
      %22 = dma.hbm_to_vmem [thread:$0]  %s0, 256, %s17, [#allocation4], 128, 128, 8
    $region5: #{linear_block_apply.1} parent=1 // pred_fallthru
      _
    // Predicated region
    $region6: #{linear_block_apply.1} parent=1 // pred_check
      _
    $region7: #{linear_block_apply.1} parent=1 // pred_check_branch
      %24 = sbr.rel (0) target = $region9
    $region8: #{linear_block_apply.1} parent=1 // pred_region
      %s26 = ssub.s32 512, 512
      %27 = vsyncadd [#allocation6], %s26
      %s28 = sshll.u32 [#allocation5], 4
      %s29 = int_to_ptr.vmem [resolvable:$true] %s28
      %34 = dma.hbm_to_vmem [thread:$0]  %s1, 512, %s29, [#allocation6], 128, 128, 8
    $region9: #{linear_block_apply.1} parent=1 // pred_fallthru
      _
    // Predicated region
    $region10: #{linear_block_apply.1} parent=1 // pred_check
      _
    $region11: #{linear_block_apply.1} parent=1 // pred_check_branch
      %36 = sbr.rel (0) target = $region13
    $region12: #{linear_block_apply.1} parent=1 // pred_region
      _
    $region13: #{linear_block_apply.1} parent=1 // pred_fallthru
      _
    // Predicated region
    $region14: #{linear_block_apply.1} parent=1 // pred_check
      _
    $region15: #{linear_block_apply.1} parent=1 // pred_check_branch
      %38 = sbr.rel (0) target = $region17
    $region16: #{linear_block_apply.1} parent=1 // pred_region
      _
    $region17: #{linear_block_apply.1} parent=1 // pred_fallthru
      _
    // Predicated region
    $region18: #{linear_block_apply.1} parent=1 // pred_check
      _
    $region19: #{linear_block_apply.1} parent=1 // pred_check_branch
      %40 = sbr.rel (0) target = $region21
    $region20: #{linear_block_apply.1} parent=1 // pred_region
      %41 = dma.done [#allocation4], 256
    $region21: #{linear_block_apply.1} parent=1 // pred_fallthru
      _
    // Predicated region
    $region22: #{linear_block_apply.1} parent=1 // pred_check
      _
    $region23: #{linear_block_apply.1} parent=1 // pred_check_branch
      %43 = sbr.rel (0) target = $region25
    $region24: #{linear_block_apply.1} parent=1 // pred_region
      %44 = dma.done [#allocation6], 512
    $region25: #{linear_block_apply.1} parent=1 // pred_fallthru
      _
    %p45 = scmp.eq.s32.totalorder 0, 0
    // Predicated region
    $region26: #{linear_block_apply.1} parent=1 // pred_check
      %p46 = pneg %p45
    $region27: #{linear_block_apply.1} parent=1 // pred_check_branch
      %48 = sbr.rel (%p46) target = $region29
    $region28: #{linear_block_apply.1} parent=1 // pred_region
      %49 = vst [vmem:[#allocation2] sm:$0xff] 0.0
      %50 = vst [vmem:[#allocation2 + $0x8] sm:$0xff] 0.0
    $region29: #{linear_block_apply.1} parent=1 // pred_fallthru
      _
    %v51 = vld [vmem:[#allocation3] sm:$0xff]
    %v52 = vld [vmem:[#allocation3 + $0x8] sm:$0xff]
    %v53 = vld [vmem:[#allocation2] sm:$0xff]
    %v54 = vld [vmem:[#allocation2 + $0x8] sm:$0xff]
    %v55 = vld [vmem:[#allocation5] sm:$0xff]
    %v56 = vld [vmem:[#allocation5 + $0x8] sm:$0xff]
    %v57 = vld [vmem:[#allocation5 + $0x10] sm:$0xff]
    %v58 = vld [vmem:[#allocation5 + $0x18] sm:$0xff]
    %vm59 = vcmask 261120
    %v61 = vsel %vm59, %v51, 0
    %v64 = vsel %vm59, %v52, 0
    %66 = vmatprep.subr.mxu0 0.0
    %67 = vmatpush1.msra.mxu0 %v55
    %68 = vmatprep.subr.mxu0 0.0
    %69 = vmatpush1.msra.mxu0 %v56
    %70 = vmatprep.subr.mxu0 0.0
    %71 = vmatpush1.msra.mxu0 %v57
    %72 = vmatprep.subr.mxu0 0.0
    %73 = vmatpush1.msra.mxu0 %v58
    %74 = vmatprep.subr.mxu0 0.0
    %75 = vmatpush1.msra.mxu0 0.0
    %76 = vmatprep.subr.mxu0 0.0
    %77 = vmatpush1.msra.mxu0 0.0
    %78 = vmatprep.subr.mxu0 0.0
    %79 = vmatpush1.msra.mxu0 0.0
    %80 = vmatprep.subr.mxu0 0.0
    %81 = vmatpush1.msra.mxu0 0.0
    %82 = vmatprep.subr.mxu0 0.0
    %83 = vmatpush1.msra.mxu0 0.0
    %84 = vmatprep.subr.mxu0 0.0
    %85 = vmatpush1.msra.mxu0 0.0
    %86 = vmatprep.subr.mxu0 0.0
    %87 = vmatpush1.msra.mxu0 0.0
    %88 = vmatprep.subr.mxu0 0.0
    %89 = vmatpush1.msra.mxu0 0.0
    %90 = vmatprep.subr.mxu0 0.0
    %91 = vmatpush1.msra.mxu0 0.0
    %92 = vmatprep.subr.mxu0 0.0
    %93 = vmatpush1.msra.mxu0 0.0
    %94 = vmatprep.subr.mxu0 0.0
    %95 = vmatpush1.msra.mxu0 0.0
    %96 = vmatprep.subr.mxu0 0.0
    %97 = vmatpush1.msra.mxu0 0.0
    %98 = vmatprep.subr.mxu0 0.0
    %99 = vmatpush1.msra.mxu0 0.0
    %100 = vmatprep.subr.mxu0 0.0
    %101 = vmatpush1.msra.mxu0 0.0
    %102 = vmatprep.subr.mxu0 0.0
    %103 = vmatpush1.msra.mxu0 0.0
    %104 = vmatprep.subr.mxu0 0.0
    %105 = vmatpush1.msra.mxu0 0.0
    %106 = vmatprep.subr.mxu0 0.0
    %107 = vmatpush1.msra.mxu0 0.0
    %108 = vmatprep.subr.mxu0 0.0
    %109 = vmatpush1.msra.mxu0 0.0
    %110 = vmatprep.subr.mxu0 0.0
    %111 = vmatpush1.msra.mxu0 0.0
    %112 = vmatprep.subr.mxu0 0.0
    %113 = vmatpush1.msra.mxu0 0.0
    %114 = vmatprep.subr.mxu0 0.0
    %115 = vmatpush1.msra.mxu0 0.0
    %116 = vmatprep.subr.mxu0 0.0
    %117 = vmatpush1.msra.mxu0 0.0
    %118 = vmatprep.subr.mxu0 0.0
    %119 = vmatpush1.msra.mxu0 0.0
    %120 = vmatprep.subr.mxu0 0.0
    %121 = vmatpush1.msra.mxu0 0.0
    %122 = vmatprep.subr.mxu0 0.0
    %123 = vmatpush1.msra.mxu0 0.0
    %124 = vmatprep.subr.mxu0 0.0
    %125 = vmatpush1.msra.mxu0 0.0
    %126 = vmatprep.subr.mxu0 0.0
    %127 = vmatpush1.msra.mxu0 0.0
    %128 = vmatprep.subr.mxu0 0.0
    %129 = vmatpush1.msra.mxu0 0.0
    %130 = vmatprep.mubr.f32.mxu0 0.0
    %131 = vmatmul.mubr.f32.gmra.mrb[0].mxu0 %v61
    %v132 = vpop.f32.mrb[0].mxu0
    %v133 = vadd.f32 0.0, %v132
    %v134 = vpop.f32.mrb[0].mxu0
    %135 = vmatprep.mubr.f32.mxu0 0.0
    %136 = vmatmul.mubr.f32.gmra.mrb[0].mxu0 %v64
    %v137 = vpop.f32.mrb[0].mxu0
    %v138 = vadd.f32 0.0, %v137
    %v139 = vpop.f32.mrb[0].mxu0
    %140 = vdwg.mxu0
    %v141 = vadd.f32 %v53, %v133
    %v142 = vadd.f32 %v54, %v138
    %143 = vst [vmem:[#allocation2] sm:$0xff] %v141
    %144 = vst [vmem:[#allocation2 + $0x8] sm:$0xff] %v142
    // Predicated region
    $region30: #{linear_block_apply.1} parent=1 // pred_check
      %p145 = pneg %p45
    $region31: #{linear_block_apply.1} parent=1 // pred_check_branch
      %147 = sbr.rel (%p145) target = $region33
    $region32: #{linear_block_apply.1} parent=1 // pred_region
      %v148 = vld [vmem:[#allocation2] sm:$0xff]
      %v149 = vld [vmem:[#allocation2 + $0x8] sm:$0xff]
      %150 = vadd.xlane.f32.xlu0 %v148
      %v151 = vpop.xlane.xlu0 %150
      %152 = vadd.xlane.f32.xlu0 %v149
      %v153 = vpop.xlane.xlu0 %152
      %v154 = vmul.f32 %v148, %v148
      %v155 = vmul.f32 %v149, %v149
      %156 = vadd.xlane.f32.xlu0 %v154
      %v157 = vpop.xlane.xlu0 %156
      %158 = vadd.xlane.f32.xlu0 %v155
      %v159 = vpop.xlane.xlu0 %158
      %v160 = vmul.f32 %v151, 0.015625
      %v161 = vmul.f32 %v153, 0.015625
      %v162 = vmul.f32 %v157, 0.015625
      %v163 = vmul.f32 %v159, 0.015625
      %v164 = vmul.f32 %v160, %v160
      %v165 = vmul.f32 %v161, %v161
      %v166 = vsub.f32 %v162, %v164
      %v167 = vsub.f32 %v163, %v165
      %v168 = vmax.f32 %v166, 0.0
      %v169 = vmax.f32 %v167, 0.0
      %v170 = vsub.f32 %v148, %v160
      %v171 = vsub.f32 %v149, %v161
      %v172 = vadd.f32 %v168, 1e-05
      %v173 = vadd.f32 %v169, 1e-05
      %v174 = vrsqrt.pop %v172
      %v175 = vrsqrt.pop %v173
      %v176 = vmul.f32 %v170, %v174
      %v177 = vmul.f32 %v171, %v175
      %v178 = vld [vmem:[%s2] sm:$0x1]
      %v180 = vlaneseq
      %v181 = vshrl.u32 %v180, 7
      %v182 = vsub.s32 0, %v181
      %v183 = vrot.slane %v178, %v182
      %v185 = vmul.f32 %v176, %v183
      %v186 = vmul.f32 %v177, %v183
      %v187 = vld [vmem:[%s3] sm:$0x1]
      %v189 = vlaneseq
      %v190 = vshrl.u32 %v189, 7
      %v191 = vsub.s32 0, %v190
      %v192 = vrot.slane %v187, %v191
      %v194 = vadd.f32 %v185, %v192
      %v195 = vadd.f32 %v186, %v192
      %v196 = vmul.f32 %v194, 0.5
      %v197 = vmul.f32 %v195, 0.5
      %v198 = vmul.f32 %v194, 0.70710677
      %v199 = vmul.f32 %v195, 0.70710677
      %v200 = verf.f32.pop %v198
      %v201 = verf.f32.pop %v199
      %v202 = vadd.f32 %v200, 1.0
      %v203 = vadd.f32 %v201, 1.0
      %v204 = vmul.f32 %v196, %v202
      %v205 = vmul.f32 %v197, %v203
      %206 = vst [vmem:[%s4] sm:$0xff] %v204
      %207 = vst [vmem:[%s4 + $0x8] sm:$0xff] %v205
    $region33: #{linear_block_apply.1} parent=1 // pred_fallthru
      _
    // Predicated region
    $region34: #{linear_block_apply.1} parent=1 // pred_check
      _
    $region35: #{linear_block_apply.1} parent=1 // pred_check_branch
      %209 = sbr.rel (0) target = $region37
    $region36: #{linear_block_apply.1} parent=1 // pred_region
      _
    $region37: #{linear_block_apply.1} parent=1 // pred_fallthru
      _
    // Predicated region
    $region38: #{linear_block_apply.1} parent=1 // pred_check
      _
    $region39: #{linear_block_apply.1} parent=1 // pred_check_branch
      %211 = sbr.rel (0) target = $region41
    $region40: #{linear_block_apply.1} parent=1 // pred_region
      _
    $region41: #{linear_block_apply.1} parent=1 // pred_fallthru
      _
    %212 = vsyncpa [#allocation4], 1
    %213 = vsyncpa [#allocation6], 1

</llo_original>
